<compile_context>
chip_gen: v6e
topology: v6e:2x2x1
jax: 0.10.0
libtpu: 0.0.40
codegen_flags: <defaults>
</compile_context>

<pallas_src>
import jax
import jax.numpy as jnp
from jax import lax
from jax.experimental import pallas as pl
from jax.experimental.pallas import tpu as pltpu


def _round_up(x, m):
    return ((x + m - 1) // m) * m


def _hdot(a, b):
    return jnp.dot(a, b, precision=lax.Precision.HIGHEST)


def _matrix_power(a, n):
    """a**n (n >= 0, Python int) via binary exponentiation, f32-accurate dots."""
    out = jnp.eye(a.shape[0], dtype=a.dtype)
    base = a
    n = int(n)
    while n > 0:
        if n & 1:
            out = _hdot(out, base)
        n >>= 1
        if n:
            base = _hdot(base, base)
    return out


def sensei_kernel(x_ref, y_ref, w_ref, b_ref, t_ref, noise_ref,
                  ypred_ref, xworst_ref, pdx_ref, pyl_ref):
    x = x_ref[...]                       # [BT, Dp]
    w = w_ref[...]                       # [Dp, Op]

    # ---- Y_pred = network(X) -------------------------------------------------
    y_pred = jnp.dot(x, w, preferred_element_type=jnp.float32) + b_ref[...]
    ypred_ref[...] = y_pred

    # ---- auditor.generate_worst_case_examples (collapsed) ---------------------
    # SGD ascent on delta = X_worst - X is linear:
    #   delta <- (1 - 2*lr*lamb) * delta + 2*lr * delta @ (W W^T)
    # so nsteps of it equal a single matmul with T = (c1*I + c2*W W^T)^nsteps,
    # precomputed in the wrapper.
    # TODO(synk): reference SenSeIAuditor uses torch.optim.Adam; plain SGD ascent
    #             with the same fixed step count is used here.
    delta = jnp.dot(noise_ref[...], t_ref[...],
                    preferred_element_type=jnp.float32)
    xworst_ref[...] = x + delta

    # ---- per-tile partial sums (row-reduced; finalized in JAX) ----------------
    dyw = jnp.dot(delta, w, preferred_element_type=jnp.float32)  # Ypred_worst - Ypred
    err = y_pred - y_ref[...]

    pdx_ref[...] = jnp.sum(delta * delta, axis=0, keepdims=True)[None]    # (1,1,Dp)
    pyl_ref[...] = jnp.concatenate(
        [jnp.sum(err * err, axis=0, keepdims=True),      # loss_fn partial
         jnp.sum(dyw * dyw, axis=0, keepdims=True)],     # distance_y partial
        axis=0)[None]                                                     # (1,2,Op)


def _vmem_capacity_bytes():
    try:
        cap = getattr(pltpu.get_tpu_info(), "vmem_capacity_bytes", None)
        if cap:
            return int(cap)
    except Exception:
        pass
    return 64 << 20        # conservative fallback (v7x per-TensorCore VMEM)


def _pick_b_tile(B, Dp, Op, budget_bytes):
    """Batch-tile size: minimize padded rows, then maximize the tile, subject to
    the VMEM budget and (when the batch allows) >= 2 grid tiles so the
    'parallel' batch axis can split across TensorCores (v7x)."""
    B8 = _round_up(B, 8)

    def vmem_need(bt):
        streamed = 3 * bt * Dp + 2 * bt * Op + Dp + 2 * Op   # X, noise, Xworst, Y, Ypred, partials
        temps = bt * Dp + 3 * bt * Op                        # delta, dyw, err, live y_pred
        return 4 * (2 * streamed + temps)                    # f32, double-buffered pipeline

    bt_fit = 8
    cand = 8
    while cand <= 4096 and vmem_need(cand) <= budget_bytes:
        bt_fit = cand
        cand += 8

    bt_par = _round_up(-(-B8 // 2), 8) if B8 >= 16 else B8   # force >= 2 tiles if possible
    bt_max = max(8, min(bt_fit, bt_par, B8))

    best_key, best_bt = None, 8
    for bt in range(8, bt_max + 1, 8):
        pad = _round_up(B8, bt) - B8
        key = (pad, -bt)
        if best_key is None or key < best_key:
            best_key, best_bt = key, bt
    return best_bt


def sensei_forward_train(X, Y, W, b, noise, lamb, eps, rho,
                         auditor_lr, auditor_nsteps):
    B, D = X.shape
    O = W.shape[1]
    f32 = jnp.float32

    # pad feature dims to lane width (lane-dense stores, full MXU tiles)
    Dp = _round_up(D, 128)
    Op = _round_up(O, 128)

    # generation-aware VMEM sizing
    vmem_cap = _vmem_capacity_bytes()
    vmem_limit = int(min(max(int(vmem_cap * 0.72), 16 << 20), 96 << 20))
    resident_bytes = 4 * 2 * (Dp * Op + Op + Dp * Dp)        # W, b, T (double-buffered)
    budget = max(vmem_limit - resident_bytes - (2 << 20), 1 << 20)

    bt = _pick_b_tile(B, Dp, Op, budget)
    Bp = _round_up(_round_up(B, 8), bt)
    num_tiles = Bp // bt

    Xp = jnp.pad(X.astype(f32), ((0, Bp - B), (0, Dp - D)))
    Np = jnp.pad(noise.astype(f32), ((0, Bp - B), (0, Dp - D)))
    Wp = jnp.pad(W.astype(f32), ((0, Dp - D), (0, Op - O)))
    bp = jnp.pad(b.astype(f32), ((0, 0), (0, Op - O)))
    Yp = jnp.pad(Y.astype(f32), ((0, Bp - B), (0, Op - O)))
    if Bp > B:
        # padded rows: y_pred = 0 @ W + b = b, so set Y there to b -> zero loss
        Yp = Yp.at[B:, :].set(bp[0])

    # Collapse the linear ascent recursion into one resident matrix:
    #   T = (c1*I + c2 * W W^T)^nsteps,  c1 = 1 - 2*lr*lamb, c2 = 2*lr
    # (padded rows/cols of W are zero, so padded delta columns stay exactly zero)
    c1 = 1.0 - 2.0 * auditor_lr * lamb
    c2 = 2.0 * auditor_lr
    A = c1 * jnp.eye(Dp, dtype=f32) + c2 * _hdot(Wp, Wp.T)
    Tp = _matrix_power(A, auditor_nsteps)

    flops = (2 * Bp * Dp * Op          # y_pred
             + 2 * Bp * Dp * Dp        # delta = noise @ T
             + 2 * Bp * Dp * Op)       # dyw = delta @ W
    bytes_accessed = 4 * (2 * Bp * Dp + Bp * Op              # X, noise, Y in
                          + Dp * Op + Op + Dp * Dp           # W, b, T in
                          + Bp * Op + Bp * Dp                # Y_pred, X_worst out
                          + num_tiles * (Dp + 2 * Op))       # partials out

    y_pred, x_worst, part_dx, part_yl = pl.pallas_call(
        sensei_kernel,
        grid=(num_tiles,),
        in_specs=[
            pl.BlockSpec((bt, Dp), lambda i: (i, 0)),        # X
            pl.BlockSpec((bt, Op), lambda i: (i, 0)),        # Y
            pl.BlockSpec((Dp, Op), lambda i: (0, 0)),        # W (resident)
            pl.BlockSpec((1, Op), lambda i: (0, 0)),         # b (resident)
            pl.BlockSpec((Dp, Dp), lambda i: (0, 0)),        # T (resident)
            pl.BlockSpec((bt, Dp), lambda i: (i, 0)),        # noise
        ],
        out_specs=(
            pl.BlockSpec((bt, Op), lambda i: (i, 0)),        # Y_pred
            pl.BlockSpec((bt, Dp), lambda i: (i, 0)),        # X_worst
            pl.BlockSpec((1, 1, Dp), lambda i: (i, 0, 0)),   # per-tile dist_x lane partials
            pl.BlockSpec((1, 2, Op), lambda i: (i, 0, 0)),   # per-tile loss / dist_y lane partials
        ),
        out_shape=(
            jax.ShapeDtypeStruct((Bp, Op), f32),
            jax.ShapeDtypeStruct((Bp, Dp), f32),
            jax.ShapeDtypeStruct((num_tiles, 1, Dp), f32),
            jax.ShapeDtypeStruct((num_tiles, 2, Op), f32),
        ),
        # Padded-noise buffer reused for X_worst.  NOTE: safe only while the
        # noise / X_worst BlockSpecs keep identical block shapes & index maps and
        # the kernel never re-reads noise after writing xworst.
        input_output_aliases={5: 1},
        compiler_params=pltpu.CompilerParams(
            dimension_semantics=("parallel",),
            vmem_limit_bytes=vmem_limit),
        cost_estimate=pl.CostEstimate(flops=int(flops), transcendentals=0,
                                      bytes_accessed=int(bytes_accessed)),
    )(Xp, Yp, Wp, bp, Tp, Np)

    # ---- cross-tile finalize (scalar math) in plain JAX -----------------------
    sum_dx = jnp.sum(part_dx)
    sum_loss = jnp.sum(part_yl[:, 0, :])
    sum_dy = jnp.sum(part_yl[:, 1, :])
    batch = jnp.float32(B)
    mean_dist_x = sum_dx / batch
    lr_factor = jnp.maximum(mean_dist_x, eps) / jnp.minimum(mean_dist_x, eps)
    new_lamb = jnp.maximum(jnp.float32(1e-5),
                           lamb + lr_factor * (mean_dist_x - eps))
    fair_loss = (sum_loss + rho * sum_dy) / batch

    return y_pred[:B, :O], x_worst[:B, :D], fair_loss, new_lamb


def _reference(X, Y, W, b, noise, lamb, eps, rho, lr, nsteps):
    """Pure-JAX reference of the same forward_train semantics (iterative form)."""
    hi = lax.Precision.HIGHEST
    y_pred = jnp.dot(X, W, precision=hi) + b
    delta = noise
    for _ in range(nsteps):
        g = 2.0 * jnp.dot(jnp.dot(delta, W, precision=hi), W.T, precision=hi) \
            - 2.0 * lamb * delta
        delta = delta + lr * g
    x_worst = X + delta
    mean_dist_x = jnp.mean(jnp.sum(delta ** 2, axis=-1))
    lr_factor = jnp.maximum(mean_dist_x, eps) / jnp.minimum(mean_dist_x, eps)
    new_lamb = jnp.maximum(1e-5, lamb + lr_factor * (mean_dist_x - eps))
    y_pred_worst = jnp.dot(x_worst, W, precision=hi) + b
    fair_loss = jnp.mean(jnp.sum((y_pred - Y) ** 2, axis=-1)
                         + rho * jnp.sum((y_pred - y_pred_worst) ** 2, axis=-1))
    return y_pred, x_worst, fair_loss, new_lamb


if __name__ == "__main__":
    key = jax.random.PRNGKey(0)
    k1, k2, k3, k4, k5 = jax.random.split(key, 5)

    B, D, O = 8, 32, 16                     # batch, input features, outputs
    X = jax.random.normal(k1, (B, D), jnp.float32)
    Y = jax.random.normal(k2, (B, O), jnp.float32)
    W = 0.1 * jax.random.normal(k3, (D, O), jnp.float32)
    b = 0.1 * jax.random.normal(k4, (1, O), jnp.float32)
    noise = 0.01 * jax.random.normal(k5, (B, D), jnp.float32)

    rho, eps, lamb = 5.0, 0.1, 1.0
    auditor_nsteps, auditor_lr = 10, 0.01

    # reference first (its own unpadded buffers; kernel uses fresh padded copies)
    yp_r, xw_r, loss_r, lamb_r = _reference(
        X, Y, W, b, noise, lamb, eps, rho, auditor_lr, auditor_nsteps)

    y_pred, x_worst, fair_loss, new_lamb = sensei_forward_train(
        X, Y, W, b, noise, lamb, eps, rho, auditor_lr, auditor_nsteps)
    jax.block_until_ready((y_pred, x_worst, fair_loss, new_lamb))

    assert jnp.allclose(y_pred, yp_r, rtol=1e-4, atol=1e-5)
    assert jnp.allclose(x_worst, xw_r, rtol=1e-4, atol=1e-5)
    assert jnp.allclose(fair_loss, loss_r, rtol=1e-4, atol=1e-5)
    assert jnp.allclose(new_lamb, lamb_r, rtol=1e-4, atol=1e-5)

    print("KERNEL_OK")
</pallas_src>

<mosaic_0001>
module attributes {stable_mosaic.version = 11 : i64} {
  func.func @sensei_kernel(%arg0: i32, %arg1: memref<8x128xf32, #tpu.memory_space<vmem>>, %arg2: memref<8x128xf32, #tpu.memory_space<vmem>>, %arg3: memref<128x128xf32, #tpu.memory_space<vmem>>, %arg4: memref<1x128xf32, #tpu.memory_space<vmem>>, %arg5: memref<128x128xf32, #tpu.memory_space<vmem>>, %arg6: memref<8x128xf32, #tpu.memory_space<vmem>>, %arg7: memref<8x128xf32, #tpu.memory_space<vmem>>, %arg8: memref<8x128xf32, #tpu.memory_space<vmem>>, %arg9: memref<1x1x128xf32, #tpu.memory_space<vmem>>, %arg10: memref<1x2x128xf32, #tpu.memory_space<vmem>>) attributes {dimension_semantics = [#tpu.dimension_semantics<parallel>], iteration_bounds = array<i64: 1>, scalar_prefetch = 0 : i64, scratch_operands = 0 : i64, tpu.core_type = #tpu.core_type<tc>, window_params = [{transform_indices = @transform_0, window_bounds = array<i64: 8, 128>}, {transform_indices = @transform_1, window_bounds = array<i64: 8, 128>}, {pipeline_mode = #tpu.pipeline_mode<synchronous>, transform_indices = @transform_2, window_bounds = array<i64: 128, 128>}, {pipeline_mode = #tpu.pipeline_mode<synchronous>, transform_indices = @transform_3, window_bounds = array<i64: 1, 128>}, {pipeline_mode = #tpu.pipeline_mode<synchronous>, transform_indices = @transform_4, window_bounds = array<i64: 128, 128>}, {transform_indices = @transform_5, window_bounds = array<i64: 8, 128>}, {transform_indices = @transform_6, window_bounds = array<i64: 8, 128>}, {transform_indices = @transform_7, window_bounds = array<i64: 8, 128>}, {transform_indices = @transform_8, window_bounds = array<i64: 1, 1, 128>}, {transform_indices = @transform_9, window_bounds = array<i64: 1, 2, 128>}]} {
    %c0 = arith.constant 0 : index
    %c0_0 = arith.constant 0 : index
    %0 = vector.load %arg1[%c0, %c0_0] : memref<8x128xf32, #tpu.memory_space<vmem>>, vector<8x128xf32>
    %c0_1 = arith.constant 0 : index
    %c0_2 = arith.constant 0 : index
    %1 = vector.load %arg3[%c0_1, %c0_2] : memref<128x128xf32, #tpu.memory_space<vmem>>, vector<128x128xf32>
    %cst = arith.constant dense<0.000000e+00> : vector<8x128xf32>
    %2 = tpu.matmul %0, %1, %cst {dimension_numbers = #tpu.dot_dimension_numbers<[1], [0], [0], [1], [0, 0, 1, 1], [], []>} : vector<8x128xf32>, vector<128x128xf32>, vector<8x128xf32> -> vector<8x128xf32>
    %c0_3 = arith.constant 0 : index
    %c0_4 = arith.constant 0 : index
    %3 = vector.load %arg4[%c0_3, %c0_4] : memref<1x128xf32, #tpu.memory_space<vmem>>, vector<1x128xf32>
    %4 = vector.broadcast %3 : vector<1x128xf32> to vector<8x128xf32>
    %5 = arith.addf %2, %4 : vector<8x128xf32>
    %c0_5 = arith.constant 0 : index
    %c0_6 = arith.constant 0 : index
    %6 = vector.load %arg7[%c0_5, %c0_6] : memref<8x128xf32, #tpu.memory_space<vmem>>, vector<8x128xf32>
    tpu.vector_store %arg7[%c0_5, %c0_6], %5 {strides = array<i32>} : memref<8x128xf32, #tpu.memory_space<vmem>>, vector<8x128xf32>,
    %c0_7 = arith.constant 0 : index
    %c0_8 = arith.constant 0 : index
    %7 = vector.load %arg6[%c0_7, %c0_8] : memref<8x128xf32, #tpu.memory_space<vmem>>, vector<8x128xf32>
    %c0_9 = arith.constant 0 : index
    %c0_10 = arith.constant 0 : index
    %8 = vector.load %arg5[%c0_9, %c0_10] : memref<128x128xf32, #tpu.memory_space<vmem>>, vector<128x128xf32>
    %cst_11 = arith.constant dense<0.000000e+00> : vector<8x128xf32>
    %9 = tpu.matmul %7, %8, %cst_11 {dimension_numbers = #tpu.dot_dimension_numbers<[1], [0], [0], [1], [0, 0, 1, 1], [], []>} : vector<8x128xf32>, vector<128x128xf32>, vector<8x128xf32> -> vector<8x128xf32>
    %10 = arith.addf %0, %9 : vector<8x128xf32>
    %c0_12 = arith.constant 0 : index
    %c0_13 = arith.constant 0 : index
    %11 = vector.load %arg8[%c0_12, %c0_13] : memref<8x128xf32, #tpu.memory_space<vmem>>, vector<8x128xf32>
    tpu.vector_store %arg8[%c0_12, %c0_13], %10 {strides = array<i32>} : memref<8x128xf32, #tpu.memory_space<vmem>>, vector<8x128xf32>,
    %cst_14 = arith.constant dense<0.000000e+00> : vector<8x128xf32>
    %12 = tpu.matmul %9, %1, %cst_14 {dimension_numbers = #tpu.dot_dimension_numbers<[1], [0], [0], [1], [0, 0, 1, 1], [], []>} : vector<8x128xf32>, vector<128x128xf32>, vector<8x128xf32> -> vector<8x128xf32>
    %c0_15 = arith.constant 0 : index
    %c0_16 = arith.constant 0 : index
    %13 = vector.load %arg2[%c0_15, %c0_16] : memref<8x128xf32, #tpu.memory_space<vmem>>, vector<8x128xf32>
    %14 = arith.subf %5, %13 : vector<8x128xf32>
    %15 = arith.mulf %9, %9 : vector<8x128xf32>
    %cst_17 = arith.constant dense<0.000000e+00> : vector<128xf32>
    %16 = vector.multi_reduction <add>, %15, %cst_17 [0] : vector<8x128xf32> to vector<128xf32>
    %17 = vector.shape_cast %16 : vector<128xf32> to vector<1x128xf32>
    %18 = vector.shape_cast %17 : vector<1x128xf32> to vector<1x1x128xf32>
    %c0_18 = arith.constant 0 : index
    %c0_19 = arith.constant 0 : index
    %c0_20 = arith.constant 0 : index
    %19 = vector.load %arg9[%c0_18, %c0_19, %c0_20] : memref<1x1x128xf32, #tpu.memory_space<vmem>>, vector<1x1x128xf32>
    tpu.vector_store %arg9[%c0_18, %c0_19, %c0_20], %18 {strides = array<i32>} : memref<1x1x128xf32, #tpu.memory_space<vmem>>, vector<1x1x128xf32>,
    %20 = arith.mulf %14, %14 : vector<8x128xf32>
    %cst_21 = arith.constant dense<0.000000e+00> : vector<128xf32>
    %21 = vector.multi_reduction <add>, %20, %cst_21 [0] : vector<8x128xf32> to vector<128xf32>
    %22 = vector.shape_cast %21 : vector<128xf32> to vector<1x128xf32>
    %23 = arith.mulf %12, %12 : vector<8x128xf32>
    %cst_22 = arith.constant dense<0.000000e+00> : vector<128xf32>
    %24 = vector.multi_reduction <add>, %23, %cst_22 [0] : vector<8x128xf32> to vector<128xf32>
    %25 = vector.shape_cast %24 : vector<128xf32> to vector<1x128xf32>
    %26 = tpu.concatenate %22, %25 in 0 : vector<1x128xf32>, vector<1x128xf32> -> vector<2x128xf32>
    %27 = vector.shape_cast %26 : vector<2x128xf32> to vector<1x2x128xf32>
    %c0_23 = arith.constant 0 : index
    %c0_24 = arith.constant 0 : index
    %c0_25 = arith.constant 0 : index
    %28 = vector.load %arg10[%c0_23, %c0_24, %c0_25] : memref<1x2x128xf32, #tpu.memory_space<vmem>>, vector<1x2x128xf32>
    tpu.vector_store %arg10[%c0_23, %c0_24, %c0_25], %27 {strides = array<i32>} : memref<1x2x128xf32, #tpu.memory_space<vmem>>, vector<1x2x128xf32>,
    return
  }
  func.func @transform_0(%arg0: i32) -> (i32, i32) {
    %c0_i32 = arith.constant 0 : i32
    %c0_i32_0 = arith.constant 0 : i32
    return %arg0, %c0_i32 : i32, i32
  }
  func.func @transform_1(%arg0: i32) -> (i32, i32) {
    %c0_i32 = arith.constant 0 : i32
    %c0_i32_0 = arith.constant 0 : i32
    return %arg0, %c0_i32 : i32, i32
  }
  func.func @transform_2(%arg0: i32) -> (i32, i32) {
    %c0_i32 = arith.constant 0 : i32
    %c0_i32_0 = arith.constant 0 : i32
    %c0_i32_1 = arith.constant 0 : i32
    return %c0_i32, %c0_i32_0 : i32, i32
  }
  func.func @transform_3(%arg0: i32) -> (i32, i32) {
    %c0_i32 = arith.constant 0 : i32
    %c0_i32_0 = arith.constant 0 : i32
    %c0_i32_1 = arith.constant 0 : i32
    return %c0_i32, %c0_i32_0 : i32, i32
  }
  func.func @transform_4(%arg0: i32) -> (i32, i32) {
    %c0_i32 = arith.constant 0 : i32
    %c0_i32_0 = arith.constant 0 : i32
    %c0_i32_1 = arith.constant 0 : i32
    return %c0_i32, %c0_i32_0 : i32, i32
  }
  func.func @transform_5(%arg0: i32) -> (i32, i32) {
    %c0_i32 = arith.constant 0 : i32
    %c0_i32_0 = arith.constant 0 : i32
    return %arg0, %c0_i32 : i32, i32
  }
  func.func @transform_6(%arg0: i32) -> (i32, i32) {
    %c0_i32 = arith.constant 0 : i32
    %c0_i32_0 = arith.constant 0 : i32
    return %arg0, %c0_i32 : i32, i32
  }
  func.func @transform_7(%arg0: i32) -> (i32, i32) {
    %c0_i32 = arith.constant 0 : i32
    %c0_i32_0 = arith.constant 0 : i32
    return %arg0, %c0_i32 : i32, i32
  }
  func.func @transform_8(%arg0: i32) -> (i32, i32, i32) {
    %c0_i32 = arith.constant 0 : i32
    %c0_i32_0 = arith.constant 0 : i32
    %c0_i32_1 = arith.constant 0 : i32
    return %arg0, %c0_i32, %c0_i32_0 : i32, i32, i32
  }
  func.func @transform_9(%arg0: i32) -> (i32, i32, i32) {
    %c0_i32 = arith.constant 0 : i32
    %c0_i32_0 = arith.constant 0 : i32
    %c0_i32_1 = arith.constant 0 : i32
    return %arg0, %c0_i32, %c0_i32_0 : i32, i32, i32
  }
}

</mosaic_0001>

<llo_original>
// kernel: tpu_custom_call.1
$region0: #{tpu_custom_call.1}
  #allocation0 [shape = 'u32[]', space=smem, size = 0x4, offset = 0x4, fixed_abs, tag = 'smem constant byte address 0x4 - core index']
  #allocation1 [shape = 'u32[144,128]{1,0:T(1,128)}', space=vmem, size = 0x12000, scoped, tag = 'internal scratch']
  %s0 = inlined_call_operand.vmem [shape: f32[8,128], index: 0, kind: input, shape index: {}]
  %s1 = inlined_call_operand.vmem [shape: f32[8,128], index: 1, kind: input, shape index: {}]
  %s2 = inlined_call_operand.hbm [shape: f32[128,128], index: 2, kind: input, shape index: {}]
  %s3 = inlined_call_operand.vmem [shape: f32[1,128], index: 3, kind: input, shape index: {}]
  %s4 = inlined_call_operand.hbm [shape: f32[128,128], index: 4, kind: input, shape index: {}]
  %s5 = inlined_call_operand.hbm [shape: f32[8,128], index: 5, kind: input, shape index: {}, may-alias: {5,7}]
  %s6 = inlined_call_operand.hbm [shape: f32[8,128], index: 6, kind: output, shape index: {0}]
  %s7 = inlined_call_operand.hbm [shape: f32[8,128], index: 7, kind: output, shape index: {1}, may-alias: {5,7}]
  %s8 = inlined_call_operand.hbm [shape: f32[1,1,128], index: 8, kind: output, shape index: {2}]
  %s9 = inlined_call_operand.hbm [shape: f32[1,2,128], index: 9, kind: output, shape index: {3}]
  %10 = xla_tuple %s6, %s7, %s8, %s9
  %s11 = sld [smem:[#allocation0]]
  $region70: #{tpu_custom_call.1} parent=0
    _
  %s13 = ssub.s32 1, %s11
  %s14 = scalar_select 0, %s13, %s11
  $region1: #{tpu_custom_call.1} parent=0
    #allocation2 [shape = 'u8[65536]{0}', space=vmem, size = 0x10000, scoped, tag = 'input window, operand 2, single buffered']
    #allocation3 [shape = 's32[1]{0}', space=sflag, size = 0x4, scoped, tag = 'scoped memory for tpu_custom_call.1']
    #allocation4 [shape = 's32[1]{0}', space=sflag, size = 0x4, scoped, tag = 'scoped memory for tpu_custom_call.1']
    #allocation5 [shape = 'u8[65536]{0}', space=vmem, size = 0x10000, scoped, tag = 'input window, operand 4, single buffered']
    #allocation6 [shape = 's32[1]{0}', space=sflag, size = 0x4, scoped, tag = 'scoped memory for tpu_custom_call.1']
    #allocation7 [shape = 'u8[4096]{0}', space=vmem, size = 0x1000, scoped, tag = 'input window, operand 5, single buffered']
    #allocation8 [shape = 'u8[4096]{0}', space=vmem, size = 0x1000, scoped, tag = 'output window, operand 0, single buffered']
    #allocation9 [shape = 'u8[4096]{0}', space=vmem, size = 0x1000, scoped, tag = 'output window, operand 1, single buffered']
    #allocation10 [shape = 's32[1]{0}', space=sflag, size = 0x4, scoped, tag = 'scoped memory for tpu_custom_call.1']
    #allocation11 [shape = 'u8[512]{0}', space=vmem, size = 0x400, scoped, tag = 'output window, operand 2, single buffered']
    #allocation12 [shape = 'u8[1024]{0}', space=vmem, size = 0x400, scoped, tag = 'output window, operand 3, single buffered']
    #allocation13 [shape = 's32[1]{0}', space=sflag, size = 0x4, scoped, tag = 'scoped memory for tpu_custom_call.1']
    %15 = vsyncpa [#allocation3], 0
    %16 = vsyncpa [#allocation6], 0
    %17 = vsyncpa [#allocation4], 0
    %18 = vsyncpa [#allocation10], 0
    %19 = vsyncpa [#allocation13], 0
    // Predicated region
    $region2: #{tpu_custom_call.1} parent=1 // pred_check
      _
    $region3: #{tpu_custom_call.1} parent=1 // pred_check_branch
      %21 = sbr.rel (0) target = $region5
    $region4: #{tpu_custom_call.1} parent=1 // pred_region
      _
    $region5: #{tpu_custom_call.1} parent=1 // pred_fallthru
      _
    // Predicated region
    $region6: #{tpu_custom_call.1} parent=1 // pred_check
      _
    $region7: #{tpu_custom_call.1} parent=1 // pred_check_branch
      %23 = sbr.rel (0) target = $region9
    $region8: #{tpu_custom_call.1} parent=1 // pred_region
      _
    $region9: #{tpu_custom_call.1} parent=1 // pred_fallthru
      _
    // Predicated region
    $region10: #{tpu_custom_call.1} parent=1 // pred_check
      _
    $region11: #{tpu_custom_call.1} parent=1 // pred_check_branch
      %25 = sbr.rel (0) target = $region13
    $region12: #{tpu_custom_call.1} parent=1 // pred_region
      %s27 = ssub.s32 2048, 2048
      %28 = vsyncadd [#allocation3], %s27
      %s29 = sshll.u32 [#allocation2], 4
      %s30 = int_to_ptr.vmem [resolvable:$true] %s29
      %35 = dma.hbm_to_vmem [thread:$0]  %s2, 2048, %s30, [#allocation3], 128, 128, 8
    $region13: #{tpu_custom_call.1} parent=1 // pred_fallthru
      _
    // Predicated region
    $region14: #{tpu_custom_call.1} parent=1 // pred_check
      _
    $region15: #{tpu_custom_call.1} parent=1 // pred_check_branch
      %37 = sbr.rel (0) target = $region17
    $region16: #{tpu_custom_call.1} parent=1 // pred_region
      _
    $region17: #{tpu_custom_call.1} parent=1 // pred_fallthru
      _
    // Predicated region
    $region18: #{tpu_custom_call.1} parent=1 // pred_check
      _
    $region19: #{tpu_custom_call.1} parent=1 // pred_check_branch
      %39 = sbr.rel (0) target = $region21
    $region20: #{tpu_custom_call.1} parent=1 // pred_region
      %s41 = ssub.s32 2048, 2048
      %42 = vsyncadd [#allocation6], %s41
      %s43 = sshll.u32 [#allocation5], 4
      %s44 = int_to_ptr.vmem [resolvable:$true] %s43
      %49 = dma.hbm_to_vmem [thread:$0]  %s4, 2048, %s44, [#allocation6], 128, 128, 8
    $region21: #{tpu_custom_call.1} parent=1 // pred_fallthru
      _
    // Predicated region
    $region22: #{tpu_custom_call.1} parent=1 // pred_check
      _
    $region23: #{tpu_custom_call.1} parent=1 // pred_check_branch
      %51 = sbr.rel (0) target = $region25
    $region24: #{tpu_custom_call.1} parent=1 // pred_region
      %s53 = ssub.s32 128, 128
      %54 = vsyncadd [#allocation6], %s53
      %s56 = sshll.u32 [#allocation7], 4
      %s57 = int_to_ptr.vmem [resolvable:$true] %s56
      %59 = dma.hbm_to_vmem [thread:$0]  %s5, 128, %s57, [#allocation6]
    $region25: #{tpu_custom_call.1} parent=1 // pred_fallthru
      _
    // Predicated region
    $region26: #{tpu_custom_call.1} parent=1 // pred_check
      _
    $region27: #{tpu_custom_call.1} parent=1 // pred_check_branch
      %61 = sbr.rel (0) target = $region29
    $region28: #{tpu_custom_call.1} parent=1 // pred_region
      %62 = dma.done [#allocation3], 2048
    $region29: #{tpu_custom_call.1} parent=1 // pred_fallthru
      _
    // Predicated region
    $region30: #{tpu_custom_call.1} parent=1 // pred_check
      _
    $region31: #{tpu_custom_call.1} parent=1 // pred_check_branch
      %64 = sbr.rel (0) target = $region33
    $region32: #{tpu_custom_call.1} parent=1 // pred_region
      %65 = dma.done [#allocation6], 2048
    $region33: #{tpu_custom_call.1} parent=1 // pred_fallthru
      _
    // Predicated region
    $region34: #{tpu_custom_call.1} parent=1 // pred_check
      _
    $region35: #{tpu_custom_call.1} parent=1 // pred_check_branch
      %67 = sbr.rel (0) target = $region37
    $region36: #{tpu_custom_call.1} parent=1 // pred_region
      %68 = dma.done [#allocation6], 128
    $region37: #{tpu_custom_call.1} parent=1 // pred_fallthru
      _
    %v69 = vld [vmem:[%s0] sm:$0xff]
    %v70 = vld [vmem:[#allocation2] sm:$0xff]
    %v71 = vld [vmem:[#allocation2 + $0x8] sm:$0xff]
    %v72 = vld [vmem:[#allocation2 + $0x10] sm:$0xff]
    %v73 = vld [vmem:[#allocation2 + $0x18] sm:$0xff]
    %v74 = vld [vmem:[#allocation2 + $0x20] sm:$0xff]
    %v75 = vld [vmem:[#allocation2 + $0x28] sm:$0xff]
    %v76 = vld [vmem:[#allocation2 + $0x30] sm:$0xff]
    %v77 = vld [vmem:[#allocation2 + $0x38] sm:$0xff]
    %v78 = vld [vmem:[#allocation2 + $0x40] sm:$0xff]
    %v79 = vld [vmem:[#allocation2 + $0x48] sm:$0xff]
    %v80 = vld [vmem:[#allocation2 + $0x50] sm:$0xff]
    %v81 = vld [vmem:[#allocation2 + $0x58] sm:$0xff]
    %v82 = vld [vmem:[#allocation2 + $0x60] sm:$0xff]
    %v83 = vld [vmem:[#allocation2 + $0x68] sm:$0xff]
    %v84 = vld [vmem:[#allocation2 + $0x70] sm:$0xff]
    %v85 = vld [vmem:[#allocation2 + $0x78] sm:$0xff]
    %v86 = vld [vmem:[%s3] sm:$0x1]
    %v88 = vlaneseq
    %v89 = vshrl.u32 %v88, 7
    %v90 = vsub.s32 0, %v89
    %v91 = vrot.slane %v86, %v90
    %93 = vmatprep.subr.mxu0 0.0
    %94 = vmatpush1.msra.mxu0 %v85
    %95 = vmatprep.subr.mxu0 0.0
    %96 = vmatpush1.msra.mxu0 %v84
    %97 = vmatprep.subr.mxu0 0.0
    %98 = vmatpush1.msra.mxu0 %v83
    %99 = vmatprep.subr.mxu0 0.0
    %100 = vmatpush1.msra.mxu0 %v82
    %101 = vmatprep.subr.mxu0 0.0
    %102 = vmatpush1.msra.mxu0 %v81
    %103 = vmatprep.subr.mxu0 0.0
    %104 = vmatpush1.msra.mxu0 %v80
    %105 = vmatprep.subr.mxu0 0.0
    %106 = vmatpush1.msra.mxu0 %v79
    %107 = vmatprep.subr.mxu0 0.0
    %108 = vmatpush1.msra.mxu0 %v78
    %109 = vmatprep.subr.mxu0 0.0
    %110 = vmatpush1.msra.mxu0 %v77
    %111 = vmatprep.subr.mxu0 0.0
    %112 = vmatpush1.msra.mxu0 %v76
    %113 = vmatprep.subr.mxu0 0.0
    %114 = vmatpush1.msra.mxu0 %v75
    %115 = vmatprep.subr.mxu0 0.0
    %116 = vmatpush1.msra.mxu0 %v74
    %117 = vmatprep.subr.mxu0 0.0
    %118 = vmatpush1.msra.mxu0 %v73
    %119 = vmatprep.subr.mxu0 0.0
    %120 = vmatpush1.msra.mxu0 %v72
    %121 = vmatprep.subr.mxu0 0.0
    %122 = vmatpush1.msra.mxu0 %v71
    %123 = vmatprep.subr.mxu0 0.0
    %124 = vmatpush1.msra.mxu0 %v70
    %125 = vmatprep.subr.mxu0 0.0
    %126 = vmatpush2.msra.mxu0 0.0
    %127 = vmatprep.subr.mxu0 0.0
    %128 = vmatpush2.msra.mxu0 0.0
    %129 = vmatprep.subr.mxu0 0.0
    %130 = vmatpush2.msra.mxu0 0.0
    %131 = vmatprep.subr.mxu0 0.0
    %132 = vmatpush2.msra.mxu0 0.0
    %133 = vmatprep.subr.mxu0 0.0
    %134 = vmatpush2.msra.mxu0 0.0
    %135 = vmatprep.subr.mxu0 0.0
    %136 = vmatpush2.msra.mxu0 0.0
    %137 = vmatprep.subr.mxu0 0.0
    %138 = vmatpush2.msra.mxu0 0.0
    %139 = vmatprep.subr.mxu0 0.0
    %140 = vmatpush2.msra.mxu0 0.0
    %141 = vmatprep.subr.mxu0 0.0
    %142 = vmatpush2.msra.mxu0 0.0
    %143 = vmatprep.subr.mxu0 0.0
    %144 = vmatpush2.msra.mxu0 0.0
    %145 = vmatprep.subr.mxu0 0.0
    %146 = vmatpush2.msra.mxu0 0.0
    %147 = vmatprep.subr.mxu0 0.0
    %148 = vmatpush2.msra.mxu0 0.0
    %149 = vmatprep.subr.mxu0 0.0
    %150 = vmatpush2.msra.mxu0 0.0
    %151 = vmatprep.subr.mxu0 0.0
    %152 = vmatpush2.msra.mxu0 0.0
    %153 = vmatprep.subr.mxu0 0.0
    %154 = vmatpush2.msra.mxu0 0.0
    %155 = vmatprep.subr.mxu0 0.0
    %156 = vmatpush2.msra.mxu0 0.0
    %157 = vmatprep.mubr.f32.mxu0 0.0
    %158 = vmatmul.mubr.f32.gmra.mxu0 %v69
    %v159 = vpop.f32.mrf.mxu0
    %v160 = vadd.f32 %v91, %v159
    %v161 = vpop.f32.mrf.mxu0
    %162 = vdwg.mxu0
    %163 = vst [vmem:[#allocation8] sm:$0xff] %v160
    %v164 = vld [vmem:[#allocation7] sm:$0xff]
    %v165 = vld [vmem:[#allocation5] sm:$0xff]
    %v166 = vld [vmem:[#allocation5 + $0x8] sm:$0xff]
    %v167 = vld [vmem:[#allocation5 + $0x10] sm:$0xff]
    %v168 = vld [vmem:[#allocation5 + $0x18] sm:$0xff]
    %v169 = vld [vmem:[#allocation5 + $0x20] sm:$0xff]
    %v170 = vld [vmem:[#allocation5 + $0x28] sm:$0xff]
    %v171 = vld [vmem:[#allocation5 + $0x30] sm:$0xff]
    %v172 = vld [vmem:[#allocation5 + $0x38] sm:$0xff]
    %v173 = vld [vmem:[#allocation5 + $0x40] sm:$0xff]
    %v174 = vld [vmem:[#allocation5 + $0x48] sm:$0xff]
    %v175 = vld [vmem:[#allocation5 + $0x50] sm:$0xff]
    %v176 = vld [vmem:[#allocation5 + $0x58] sm:$0xff]
    %v177 = vld [vmem:[#allocation5 + $0x60] sm:$0xff]
    %v178 = vld [vmem:[#allocation5 + $0x68] sm:$0xff]
    %v179 = vld [vmem:[#allocation5 + $0x70] sm:$0xff]
    %v180 = vld [vmem:[#allocation5 + $0x78] sm:$0xff]
    %181 = vmatprep.subr.mxu0 0.0
    %182 = vmatpush1.msra.mxu0 %v180
    %183 = vmatprep.subr.mxu0 0.0
    %184 = vmatpush1.msra.mxu0 %v179
    %185 = vmatprep.subr.mxu0 0.0
    %186 = vmatpush1.msra.mxu0 %v178
    %187 = vmatprep.subr.mxu0 0.0
    %188 = vmatpush1.msra.mxu0 %v177
    %189 = vmatprep.subr.mxu0 0.0
    %190 = vmatpush1.msra.mxu0 %v176
    %191 = vmatprep.subr.mxu0 0.0
    %192 = vmatpush1.msra.mxu0 %v175
    %193 = vmatprep.subr.mxu0 0.0
    %194 = vmatpush1.msra.mxu0 %v174
    %195 = vmatprep.subr.mxu0 0.0
    %196 = vmatpush1.msra.mxu0 %v173
    %197 = vmatprep.subr.mxu0 0.0
    %198 = vmatpush1.msra.mxu0 %v172
    %199 = vmatprep.subr.mxu0 0.0
    %200 = vmatpush1.msra.mxu0 %v171
    %201 = vmatprep.subr.mxu0 0.0
    %202 = vmatpush1.msra.mxu0 %v170
    %203 = vmatprep.subr.mxu0 0.0
    %204 = vmatpush1.msra.mxu0 %v169
    %205 = vmatprep.subr.mxu0 0.0
    %206 = vmatpush1.msra.mxu0 %v168
    %207 = vmatprep.subr.mxu0 0.0
    %208 = vmatpush1.msra.mxu0 %v167
    %209 = vmatprep.subr.mxu0 0.0
    %210 = vmatpush1.msra.mxu0 %v166
    %211 = vmatprep.subr.mxu0 0.0
    %212 = vmatpush1.msra.mxu0 %v165
    %213 = vmatprep.subr.mxu0 0.0
    %214 = vmatpush2.msra.mxu0 0.0
    %215 = vmatprep.subr.mxu0 0.0
    %216 = vmatpush2.msra.mxu0 0.0
    %217 = vmatprep.subr.mxu0 0.0
    %218 = vmatpush2.msra.mxu0 0.0
    %219 = vmatprep.subr.mxu0 0.0
    %220 = vmatpush2.msra.mxu0 0.0
    %221 = vmatprep.subr.mxu0 0.0
    %222 = vmatpush2.msra.mxu0 0.0
    %223 = vmatprep.subr.mxu0 0.0
    %224 = vmatpush2.msra.mxu0 0.0
    %225 = vmatprep.subr.mxu0 0.0
    %226 = vmatpush2.msra.mxu0 0.0
    %227 = vmatprep.subr.mxu0 0.0
    %228 = vmatpush2.msra.mxu0 0.0
    %229 = vmatprep.subr.mxu0 0.0
    %230 = vmatpush2.msra.mxu0 0.0
    %231 = vmatprep.subr.mxu0 0.0
    %232 = vmatpush2.msra.mxu0 0.0
    %233 = vmatprep.subr.mxu0 0.0
    %234 = vmatpush2.msra.mxu0 0.0
    %235 = vmatprep.subr.mxu0 0.0
    %236 = vmatpush2.msra.mxu0 0.0
    %237 = vmatprep.subr.mxu0 0.0
    %238 = vmatpush2.msra.mxu0 0.0
    %239 = vmatprep.subr.mxu0 0.0
    %240 = vmatpush2.msra.mxu0 0.0
    %241 = vmatprep.subr.mxu0 0.0
    %242 = vmatpush2.msra.mxu0 0.0
    %243 = vmatprep.subr.mxu0 0.0
    %244 = vmatpush2.msra.mxu0 0.0
    %245 = vmatprep.mubr.f32.mxu0 0.0
    %246 = vmatmul.mubr.f32.gmra.mxu0 %v164
    %v247 = vpop.f32.mrf.mxu0
    %v248 = vadd.f32 0.0, %v247
    %v249 = vpop.f32.mrf.mxu0
    %250 = vdwg.mxu0
    %v251 = vadd.f32 %v69, %v248
    %252 = vst [vmem:[#allocation9] sm:$0xff] %v251
    %253 = vmatprep.subr.mxu0 0.0
    %254 = vmatpush1.msra.mxu0 %v85
    %255 = vmatprep.subr.mxu0 0.0
    %256 = vmatpush1.msra.mxu0 %v84
    %257 = vmatprep.subr.mxu0 0.0
    %258 = vmatpush1.msra.mxu0 %v83
    %259 = vmatprep.subr.mxu0 0.0
    %260 = vmatpush1.msra.mxu0 %v82
    %261 = vmatprep.subr.mxu0 0.0
    %262 = vmatpush1.msra.mxu0 %v81
    %263 = vmatprep.subr.mxu0 0.0
    %264 = vmatpush1.msra.mxu0 %v80
    %265 = vmatprep.subr.mxu0 0.0
    %266 = vmatpush1.msra.mxu0 %v79
    %267 = vmatprep.subr.mxu0 0.0
    %268 = vmatpush1.msra.mxu0 %v78
    %269 = vmatprep.subr.mxu0 0.0
    %270 = vmatpush1.msra.mxu0 %v77
    %271 = vmatprep.subr.mxu0 0.0
    %272 = vmatpush1.msra.mxu0 %v76
    %273 = vmatprep.subr.mxu0 0.0
    %274 = vmatpush1.msra.mxu0 %v75
    %275 = vmatprep.subr.mxu0 0.0
    %276 = vmatpush1.msra.mxu0 %v74
    %277 = vmatprep.subr.mxu0 0.0
    %278 = vmatpush1.msra.mxu0 %v73
    %279 = vmatprep.subr.mxu0 0.0
    %280 = vmatpush1.msra.mxu0 %v72
    %281 = vmatprep.subr.mxu0 0.0
    %282 = vmatpush1.msra.mxu0 %v71
    %283 = vmatprep.subr.mxu0 0.0
    %284 = vmatpush1.msra.mxu0 %v70
    %285 = vmatprep.subr.mxu0 0.0
    %286 = vmatpush2.msra.mxu0 0.0
    %287 = vmatprep.subr.mxu0 0.0
    %288 = vmatpush2.msra.mxu0 0.0
    %289 = vmatprep.subr.mxu0 0.0
    %290 = vmatpush2.msra.mxu0 0.0
    %291 = vmatprep.subr.mxu0 0.0
    %292 = vmatpush2.msra.mxu0 0.0
    %293 = vmatprep.subr.mxu0 0.0
    %294 = vmatpush2.msra.mxu0 0.0
    %295 = vmatprep.subr.mxu0 0.0
    %296 = vmatpush2.msra.mxu0 0.0
    %297 = vmatprep.subr.mxu0 0.0
    %298 = vmatpush2.msra.mxu0 0.0
    %299 = vmatprep.subr.mxu0 0.0
    %300 = vmatpush2.msra.mxu0 0.0
    %301 = vmatprep.subr.mxu0 0.0
    %302 = vmatpush2.msra.mxu0 0.0
    %303 = vmatprep.subr.mxu0 0.0
    %304 = vmatpush2.msra.mxu0 0.0
    %305 = vmatprep.subr.mxu0 0.0
    %306 = vmatpush2.msra.mxu0 0.0
    %307 = vmatprep.subr.mxu0 0.0
    %308 = vmatpush2.msra.mxu0 0.0
    %309 = vmatprep.subr.mxu0 0.0
    %310 = vmatpush2.msra.mxu0 0.0
    %311 = vmatprep.subr.mxu0 0.0
    %312 = vmatpush2.msra.mxu0 0.0
    %313 = vmatprep.subr.mxu0 0.0
    %314 = vmatpush2.msra.mxu0 0.0
    %315 = vmatprep.subr.mxu0 0.0
    %316 = vmatpush2.msra.mxu0 0.0
    %317 = vmatprep.mubr.f32.mxu0 0.0
    %318 = vmatmul.mubr.f32.gmra.mxu0 %v248
    %v319 = vpop.f32.mrf.mxu0
    %v320 = vadd.f32 0.0, %v319
    %v321 = vpop.f32.mrf.mxu0
    %322 = vdwg.mxu0
    %v323 = vld [vmem:[%s1] sm:$0xff]
    %v324 = vsub.f32 %v160, %v323
    %v325 = vmul.f32 %v248, %v248
    %v326 = vrot.slane %v325, 4
    %v327 = vadd.f32 %v325, %v326
    %v328 = vrot.slane %v327, 2
    %v329 = vadd.f32 %v327, %v328
    %v330 = vrot.slane %v329, 1
    %v331 = vadd.f32 %v329, %v330
    %332 = vst [vmem:[#allocation11] sm:$0x1] %v331
    %v333 = vmul.f32 %v324, %v324
    %v334 = vrot.slane %v333, 4
    %v335 = vadd.f32 %v333, %v334
    %v336 = vrot.slane %v335, 2
    %v337 = vadd.f32 %v335, %v336
    %v338 = vrot.slane %v337, 1
    %v339 = vadd.f32 %v337, %v338
    %v340 = vmul.f32 %v320, %v320
    %v341 = vrot.slane %v340, 4
    %v342 = vadd.f32 %v340, %v341
    %v343 = vrot.slane %v342, 2
    %v344 = vadd.f32 %v342, %v343
    %v345 = vrot.slane %v344, 1
    %v346 = vadd.f32 %v344, %v345
    %vm347 = vcmask 1040384
    %v348 = vsel %vm347, %v339, %v346
    %349 = vst [vmem:[#allocation12] sm:$0x3] %v348
    // Predicated region
    $region38: #{tpu_custom_call.1} parent=1 // pred_check
      _
    $region39: #{tpu_custom_call.1} parent=1 // pred_check_branch
      %351 = sbr.rel (0) target = $region41
    $region40: #{tpu_custom_call.1} parent=1 // pred_region
      %s353 = ssub.s32 128, 128
      %354 = vsyncadd [#allocation4], %s353
      %s356 = sshll.u32 [#allocation8], 4
      %s357 = int_to_ptr.vmem [resolvable:$true] %s356
      %359 = dma.vmem_to_hbm [thread:$0]  %s357, 128, %s6, [#allocation4]
    $region41: #{tpu_custom_call.1} parent=1 // pred_fallthru
      _
    // Predicated region
    $region42: #{tpu_custom_call.1} parent=1 // pred_check
      _
    $region43: #{tpu_custom_call.1} parent=1 // pred_check_branch
      %361 = sbr.rel (0) target = $region45
    $region44: #{tpu_custom_call.1} parent=1 // pred_region
      %s363 = ssub.s32 128, 128
      %364 = vsyncadd [#allocation10], %s363
      %s366 = sshll.u32 [#allocation9], 4
      %s367 = int_to_ptr.vmem [resolvable:$true] %s366
      %369 = dma.vmem_to_hbm [thread:$0]  %s367, 128, %s7, [#allocation10]
    $region45: #{tpu_custom_call.1} parent=1 // pred_fallthru
      _
    // Predicated region
    $region46: #{tpu_custom_call.1} parent=1 // pred_check
      _
    $region47: #{tpu_custom_call.1} parent=1 // pred_check_branch
      %371 = sbr.rel (0) target = $region49
    $region48: #{tpu_custom_call.1} parent=1 // pred_region
      %s373 = ssub.s32 16, 16
      %374 = vsyncadd [#allocation10], %s373
      %s376 = sshll.u32 [#allocation11], 4
      %s377 = int_to_ptr.vmem [resolvable:$true] %s376
      %379 = dma.vmem_to_hbm [thread:$0]  %s377, 16, %s8, [#allocation10]
    $region49: #{tpu_custom_call.1} parent=1 // pred_fallthru
      _
    // Predicated region
    $region50: #{tpu_custom_call.1} parent=1 // pred_check
      _
    $region51: #{tpu_custom_call.1} parent=1 // pred_check_branch
      %381 = sbr.rel (0) target = $region53
    $region52: #{tpu_custom_call.1} parent=1 // pred_region
      %s383 = ssub.s32 32, 32
      %384 = vsyncadd [#allocation13], %s383
      %s386 = sshll.u32 [#allocation12], 4
      %s387 = int_to_ptr.vmem [resolvable:$true] %s386
      %389 = dma.vmem_to_hbm [thread:$0]  %s387, 32, %s9, [#allocation13]
    $region53: #{tpu_custom_call.1} parent=1 // pred_fallthru
      _
    // Predicated region
    $region54: #{tpu_custom_call.1} parent=1 // pred_check
      _
    $region55: #{tpu_custom_call.1} parent=1 // pred_check_branch
      %391 = sbr.rel (0) target = $region57
    $region56: #{tpu_custom_call.1} parent=1 // pred_region
      %392 = dma.done [#allocation4], 128
    $region57: #{tpu_custom_call.1} parent=1 // pred_fallthru
      _
    // Predicated region
    $region58: #{tpu_custom_call.1} parent=1 // pred_check
      _
    $region59: #{tpu_custom_call.1} parent=1 // pred_check_branch
      %394 = sbr.rel (0) target = $region61
    $region60: #{tpu_custom_call.1} parent=1 // pred_region
      %395 = dma.done [#allocation10], 128
    $region61: #{tpu_custom_call.1} parent=1 // pred_fallthru
      _
    // Predicated region
    $region62: #{tpu_custom_call.1} parent=1 // pred_check
      _
    $region63: #{tpu_custom_call.1} parent=1 // pred_check_branch
      %397 = sbr.rel (0) target = $region65
    $region64: #{tpu_custom_call.1} parent=1 // pred_region
      %398 = dma.done [#allocation10], 16
    $region65: #{tpu_custom_call.1} parent=1 // pred_fallthru
      _
    // Predicated region
    $region66: #{tpu_custom_call.1} parent=1 // pred_check
      _
    $region67: #{tpu_custom_call.1} parent=1 // pred_check_branch
      %400 = sbr.rel (0) target = $region69
    $region68: #{tpu_custom_call.1} parent=1 // pred_region
      %401 = dma.done [#allocation13], 32
    $region69: #{tpu_custom_call.1} parent=1 // pred_fallthru
      _
    %402 = vsyncpa [#allocation3], 1
    %403 = vsyncpa [#allocation6], 1
    %404 = vsyncpa [#allocation4], 1
    %405 = vsyncpa [#allocation10], 1
    %406 = vsyncpa [#allocation13], 1

</llo_original>
